<compile_context>
chip_gen: v7x
topology: tpu7x:2x2x1
jax: 0.10.0
libtpu: 0.0.40
codegen_flags: <defaults>
</compile_context>

<pallas_src>
import functools

import jax
import jax.numpy as jnp
from jax.experimental import pallas as pl
from jax.experimental.pallas import tpu as pltpu


def _dtkd_kernel(s_ref, t_ref, out_ref, *, temperature):
    s = s_ref[...].astype(jnp.float32)          # (TILE_B, C)
    t = t_ref[...].astype(jnp.float32)          # (TILE_B, C)

    # Per-row maxima (dim=1, keepdim=True in the PyTorch reference).
    s_max = jnp.max(s, axis=1, keepdims=True)   # (TILE_B, 1)
    t_max = jnp.max(t, axis=1, keepdims=True)   # (TILE_B, 1)

    # Dynamic temperatures: per-row reciprocals + broadcast multiplies
    # (no full-tile divides).
    inv_denom = pl.reciprocal(s_max + t_max, approx=False)
    s_temp = (2.0 * temperature) * s_max * inv_denom    # logits_student_temp
    t_temp = (2.0 * temperature) * t_max * inv_denom    # logits_teacher_temp
    inv_s_temp = pl.reciprocal(s_temp, approx=False)
    inv_t_temp = pl.reciprocal(t_temp, approx=False)

    # Scale first, then max-shift the *scaled* logits by their own row max.
    # This matches F.log_softmax / F.softmax numerics and remains finite even if a
    # dynamic temperature is negative (s_max, t_max of opposite signs).
    zs = s * inv_s_temp
    zt = t * inv_t_temp
    zs_sh = zs - jnp.max(zs, axis=1, keepdims=True)
    zt_sh = zt - jnp.max(zt, axis=1, keepdims=True)

    es = jnp.exp(zs_sh)
    et = jnp.exp(zt_sh)
    es_sum = jnp.sum(es, axis=1, keepdims=True)          # (TILE_B, 1)
    et_sum = jnp.sum(et, axis=1, keepdims=True)          # (TILE_B, 1)

    # sum_j pt_j * (log pt_j - log ps_j)
    #   = (1/et_sum) * sum_j et_j * (zt_sh_j - zs_sh_j) + (log es_sum - log et_sum)
    # (pt, log_ps, log_pt, kl never materialized as (TILE_B, C) tensors).
    wsum = jnp.sum(et * (zt_sh - zs_sh), axis=1, keepdims=True)
    kl_row = wsum * pl.reciprocal(et_sum, approx=False) + (
        jnp.log(es_sum) - jnp.log(et_sum))

    # Per-row weighted KL; the mean over the batch is finished in the wrapper.
    out_ref[...] = kl_row * (t_temp * s_temp)             # (TILE_B, 1)


def _vmem_capacity_bytes():
    try:
        return int(pltpu.get_tpu_info().vmem_capacity_bytes)
    except Exception:
        return 128 * 1024 * 1024   # v5e/v6e default if the query is unavailable


def _choose_tile_b(batch, n_classes, itemsize, capacity):
    """Largest row tile (multiple of 16, capped at 2048) fitting the VMEM budget.

    Budgets the *real* working set: 2 inputs x 2 pipeline buffers in the input dtype
    plus ~6 f32 (TILE_B, C) intermediates (s, t, zs_sh, zt_sh, es, et) of the fused
    softmax/KL body.  The budget is derived from the chip's VMEM capacity so v7x
    (64 MiB/TC) gets smaller tiles than v5e/v6e (128 MiB).
    """
    budget = min(48 * 1024 * 1024, int(capacity * 0.45))
    c_pad = ((n_classes + 127) // 128) * 128   # lanes are 128-padded inside VMEM
    per_row = 4 * c_pad * itemsize + 6 * c_pad * 4
    t = max(16, min(int(budget // per_row), 2048))
    t -= t % 16
    # Keep at least two grid steps whenever possible so the single "parallel" axis
    # can span both TensorCores on v7x (rows are independent, no cross-tile state).
    if batch > 16:
        half = (((batch + 1) // 2) + 15) // 16 * 16
        t = min(t, half)
    b_up = ((batch + 15) // 16) * 16
    return max(16, min(t, b_up))


def dtkd_loss(logits_student, logits_teacher, temperature=4.0, tile_b=None):
    """DTKD loss. Inputs: (B, C) logits (f32 or bf16); returns a scalar float32."""
    B, C = logits_student.shape
    assert logits_teacher.shape == (B, C)

    itemsize = jnp.dtype(logits_student.dtype).itemsize
    capacity = _vmem_capacity_bytes()
    if tile_b is None:
        tile_b = _choose_tile_b(B, C, itemsize, capacity)
    assert tile_b % 16 == 0, "tile_b must be a multiple of 16 (f32 and bf16 safe)"

    num_tiles = pl.cdiv(B, tile_b)

    # VMEM limit from the computed footprint (+ headroom), never above physical VMEM.
    c_pad = ((C + 127) // 128) * 128
    footprint = tile_b * (4 * c_pad * itemsize + 6 * c_pad * 4)
    vmem_limit = max(32 * 1024 * 1024, footprint + 8 * 1024 * 1024)
    vmem_limit = min(vmem_limit, capacity - 2 * 1024 * 1024)

    kernel = functools.partial(_dtkd_kernel, temperature=float(temperature))

    row_losses = pl.pallas_call(
        kernel,
        out_shape=jax.ShapeDtypeStruct((B, 1), jnp.float32),
        grid_spec=pltpu.PrefetchScalarGridSpec(
            num_scalar_prefetch=0,
            grid=(num_tiles,),
            in_specs=[
                # Class axis = full array dim (no 128 padding / no jnp.pad copy);
                # batch remainder handled by a partial last block.
                pl.BlockSpec((tile_b, C), lambda i: (i, 0)),
                pl.BlockSpec((tile_b, C), lambda i: (i, 0)),
            ],
            out_specs=pl.BlockSpec((tile_b, 1), lambda i: (i, 0)),
        ),
        compiler_params=pltpu.CompilerParams(
            dimension_semantics=("parallel",),   # no cross-tile state -> 2-TC on v7x
            vmem_limit_bytes=int(vmem_limit),
        ),
    )(logits_student, logits_teacher)

    # .mean() over the (B, 1) per-row weighted-KL tensor.
    return jnp.mean(row_losses)


def _dtkd_reference(logits_student, logits_teacher, temperature=4.0):
    s = logits_student.astype(jnp.float32)
    t = logits_teacher.astype(jnp.float32)
    s_max = jnp.max(s, axis=1, keepdims=True)
    t_max = jnp.max(t, axis=1, keepdims=True)
    s_temp = 2 * s_max / (t_max + s_max) * temperature
    t_temp = 2 * t_max / (t_max + s_max) * temperature
    log_ps = jax.nn.log_softmax(s / s_temp, axis=1)
    pt = jax.nn.softmax(t / t_temp, axis=1)
    kl = pt * (jnp.log(pt) - log_ps)
    return jnp.mean(jnp.sum(kl, axis=1, keepdims=True) * t_temp * s_temp)


if __name__ == "__main__":
    key = jax.random.PRNGKey(0)
    k_s, k_t = jax.random.split(key)
    B, C = 16, 32
    logits_student = jax.random.normal(k_s, (B, C), dtype=jnp.float32) * 3.0 + 1.0
    logits_teacher = jax.random.normal(k_t, (B, C), dtype=jnp.float32) * 3.0 + 1.0

    loss = dtkd_loss(logits_student, logits_teacher, temperature=4.0)
    loss = jax.block_until_ready(loss)

    ref = _dtkd_reference(logits_student, logits_teacher, temperature=4.0)
    assert jnp.allclose(loss, ref, rtol=1e-4, atol=1e-4), (loss, ref)

    print("KERNEL_OK")
</pallas_src>

<mosaic_0001>
module attributes {stable_mosaic.version = 11 : i64} {
  func.func @_dtkd_kernel(%arg0: i32, %arg1: memref<16x32xf32, #tpu.memory_space<vmem>>, %arg2: memref<16x32xf32, #tpu.memory_space<vmem>>, %arg3: memref<16x1xf32, #tpu.memory_space<vmem>>) attributes {dimension_semantics = [#tpu.dimension_semantics<parallel>], iteration_bounds = array<i64: 1>, scalar_prefetch = 0 : i64, scratch_operands = 0 : i64, tpu.core_type = #tpu.core_type<tc>, window_params = [{transform_indices = @transform_0, window_bounds = array<i64: 16, 32>}, {transform_indices = @transform_1, window_bounds = array<i64: 16, 32>}, {transform_indices = @transform_2, window_bounds = array<i64: 16, 1>}]} {
    %c0 = arith.constant 0 : index
    %c0_0 = arith.constant 0 : index
    %0 = vector.load %arg1[%c0, %c0_0] : memref<16x32xf32, #tpu.memory_space<vmem>>, vector<16x32xf32>
    %c0_1 = arith.constant 0 : index
    %c0_2 = arith.constant 0 : index
    %1 = vector.load %arg2[%c0_1, %c0_2] : memref<16x32xf32, #tpu.memory_space<vmem>>, vector<16x32xf32>
    %cst = arith.constant dense<0xFF800000> : vector<16xf32>
    %2 = vector.multi_reduction <maximumf>, %0, %cst [1] : vector<16x32xf32> to vector<16xf32>
    %3 = vector.shape_cast %2 : vector<16xf32> to vector<16x1xf32>
    %cst_3 = arith.constant dense<0xFF800000> : vector<16xf32>
    %4 = vector.multi_reduction <maximumf>, %1, %cst_3 [1] : vector<16x32xf32> to vector<16xf32>
    %5 = vector.shape_cast %4 : vector<16xf32> to vector<16x1xf32>
    %6 = arith.addf %3, %5 : vector<16x1xf32>
    %7 = tpu.reciprocal %6 : vector<16x1xf32> -> vector<16x1xf32>
    %cst_4 = arith.constant 8.000000e+00 : f32
    %8 = vector.broadcast %cst_4 : f32 to vector<16x1xf32>
    %9 = arith.mulf %8, %3 : vector<16x1xf32>
    %10 = arith.mulf %9, %7 : vector<16x1xf32>
    %cst_5 = arith.constant 8.000000e+00 : f32
    %11 = vector.broadcast %cst_5 : f32 to vector<16x1xf32>
    %12 = arith.mulf %11, %5 : vector<16x1xf32>
    %13 = arith.mulf %12, %7 : vector<16x1xf32>
    %14 = tpu.reciprocal %10 : vector<16x1xf32> -> vector<16x1xf32>
    %15 = tpu.reciprocal %13 : vector<16x1xf32> -> vector<16x1xf32>
    %16 = vector.broadcast %14 : vector<16x1xf32> to vector<16x32xf32>
    %17 = arith.mulf %0, %16 : vector<16x32xf32>
    %18 = vector.broadcast %15 : vector<16x1xf32> to vector<16x32xf32>
    %19 = arith.mulf %1, %18 : vector<16x32xf32>
    %cst_6 = arith.constant dense<0xFF800000> : vector<16xf32>
    %20 = vector.multi_reduction <maximumf>, %17, %cst_6 [1] : vector<16x32xf32> to vector<16xf32>
    %21 = vector.shape_cast %20 : vector<16xf32> to vector<16x1xf32>
    %22 = vector.broadcast %21 : vector<16x1xf32> to vector<16x32xf32>
    %23 = arith.subf %17, %22 : vector<16x32xf32>
    %cst_7 = arith.constant dense<0xFF800000> : vector<16xf32>
    %24 = vector.multi_reduction <maximumf>, %19, %cst_7 [1] : vector<16x32xf32> to vector<16xf32>
    %25 = vector.shape_cast %24 : vector<16xf32> to vector<16x1xf32>
    %26 = vector.broadcast %25 : vector<16x1xf32> to vector<16x32xf32>
    %27 = arith.subf %19, %26 : vector<16x32xf32>
    %28 = math.exp %23 : vector<16x32xf32>
    %29 = math.exp %27 : vector<16x32xf32>
    %cst_8 = arith.constant dense<0.000000e+00> : vector<16xf32>
    %30 = vector.multi_reduction <add>, %28, %cst_8 [1] : vector<16x32xf32> to vector<16xf32>
    %31 = vector.shape_cast %30 : vector<16xf32> to vector<16x1xf32>
    %cst_9 = arith.constant dense<0.000000e+00> : vector<16xf32>
    %32 = vector.multi_reduction <add>, %29, %cst_9 [1] : vector<16x32xf32> to vector<16xf32>
    %33 = vector.shape_cast %32 : vector<16xf32> to vector<16x1xf32>
    %34 = arith.subf %27, %23 : vector<16x32xf32>
    %35 = arith.mulf %29, %34 : vector<16x32xf32>
    %cst_10 = arith.constant dense<0.000000e+00> : vector<16xf32>
    %36 = vector.multi_reduction <add>, %35, %cst_10 [1] : vector<16x32xf32> to vector<16xf32>
    %37 = vector.shape_cast %36 : vector<16xf32> to vector<16x1xf32>
    %38 = tpu.reciprocal %33 : vector<16x1xf32> -> vector<16x1xf32>
    %39 = arith.mulf %37, %38 : vector<16x1xf32>
    %40 = math.log %31 : vector<16x1xf32>
    %41 = math.log %33 : vector<16x1xf32>
    %42 = arith.subf %40, %41 : vector<16x1xf32>
    %43 = arith.addf %39, %42 : vector<16x1xf32>
    %44 = arith.mulf %13, %10 : vector<16x1xf32>
    %45 = arith.mulf %43, %44 : vector<16x1xf32>
    %c0_11 = arith.constant 0 : index
    %c0_12 = arith.constant 0 : index
    %46 = vector.load %arg3[%c0_11, %c0_12] : memref<16x1xf32, #tpu.memory_space<vmem>>, vector<16x1xf32>
    tpu.vector_store %arg3[%c0_11, %c0_12], %45 {strides = array<i32>} : memref<16x1xf32, #tpu.memory_space<vmem>>, vector<16x1xf32>,
    return
  }
  func.func @transform_0(%arg0: i32) -> (i32, i32) {
    %c0_i32 = arith.constant 0 : i32
    %c0_i32_0 = arith.constant 0 : i32
    return %arg0, %c0_i32 : i32, i32
  }
  func.func @transform_1(%arg0: i32) -> (i32, i32) {
    %c0_i32 = arith.constant 0 : i32
    %c0_i32_0 = arith.constant 0 : i32
    return %arg0, %c0_i32 : i32, i32
  }
  func.func @transform_2(%arg0: i32) -> (i32, i32) {
    %c0_i32 = arith.constant 0 : i32
    %c0_i32_0 = arith.constant 0 : i32
    return %arg0, %c0_i32 : i32, i32
  }
}

</mosaic_0001>

<llo_original>
// kernel: tpu_custom_call.1
$region0: #{tpu_custom_call.1}
  #allocation0 [shape = 'u32[]', space=smem, size = 0x4, offset = 0x4, fixed_abs, tag = 'smem constant byte address 0x4 - core index']
  #allocation1 [shape = 'u32[144,128]{1,0:T(1,128)}', space=vmem, size = 0x12000, scoped, tag = 'internal scratch']
  %s0 = inlined_call_operand.hbm [shape: f32[16,32], index: 0, kind: input, shape index: {}]
  %s1 = inlined_call_operand.hbm [shape: f32[16,32], index: 1, kind: input, shape index: {}]
  %s2 = inlined_call_operand.vmem [shape: f32[16,1], index: 2, kind: output, shape index: {}]
  %s3 = sld [smem:[#allocation0]]
  $region26: #{tpu_custom_call.1} parent=0
    _
  %s5 = ssub.s32 1, %s3
  %s6 = scalar_select 0, %s5, %s3
  $region1: #{tpu_custom_call.1} parent=0
    #allocation2 [shape = 'u8[8192]{0}', space=vmem, size = 0x2000, scoped, tag = 'input window, operand 0, single buffered']
    #allocation3 [shape = 's32[1]{0}', space=sflag, size = 0x4, scoped, tag = 'scoped memory for tpu_custom_call.1']
    #allocation4 [shape = 'u8[8192]{0}', space=vmem, size = 0x2000, scoped, tag = 'input window, operand 1, single buffered']
    #allocation5 [shape = 's32[1]{0}', space=sflag, size = 0x4, scoped, tag = 'scoped memory for tpu_custom_call.1']
    %7 = vsyncpa [#allocation3], 0
    %8 = vsyncpa [#allocation5], 0
    // Predicated region
    $region2: #{tpu_custom_call.1} parent=1 // pred_check
      _
    $region3: #{tpu_custom_call.1} parent=1 // pred_check_branch
      %10 = sbr.rel (0) target = $region5
    $region4: #{tpu_custom_call.1} parent=1 // pred_region
      %s12 = ssub.s32 256, 256
      %13 = vsyncadd [#allocation3], %s12
      %s14 = sshll.u32 [#allocation2], 4
      %s15 = int_to_ptr.vmem [resolvable:$true] %s14
      %20 = dma.hbm_to_vmem [thread:$0]  %s0, 256, %s15, [#allocation3], 128, 128, 8
    $region5: #{tpu_custom_call.1} parent=1 // pred_fallthru
      _
    // Predicated region
    $region6: #{tpu_custom_call.1} parent=1 // pred_check
      _
    $region7: #{tpu_custom_call.1} parent=1 // pred_check_branch
      %22 = sbr.rel (0) target = $region9
    $region8: #{tpu_custom_call.1} parent=1 // pred_region
      %s24 = ssub.s32 256, 256
      %25 = vsyncadd [#allocation5], %s24
      %s26 = sshll.u32 [#allocation4], 4
      %s27 = int_to_ptr.vmem [resolvable:$true] %s26
      %32 = dma.hbm_to_vmem [thread:$0]  %s1, 256, %s27, [#allocation5], 128, 128, 8
    $region9: #{tpu_custom_call.1} parent=1 // pred_fallthru
      _
    // Predicated region
    $region10: #{tpu_custom_call.1} parent=1 // pred_check
      _
    $region11: #{tpu_custom_call.1} parent=1 // pred_check_branch
      %34 = sbr.rel (0) target = $region13
    $region12: #{tpu_custom_call.1} parent=1 // pred_region
      %35 = dma.done [#allocation3], 256
    $region13: #{tpu_custom_call.1} parent=1 // pred_fallthru
      _
    // Predicated region
    $region14: #{tpu_custom_call.1} parent=1 // pred_check
      _
    $region15: #{tpu_custom_call.1} parent=1 // pred_check_branch
      %37 = sbr.rel (0) target = $region17
    $region16: #{tpu_custom_call.1} parent=1 // pred_region
      %38 = dma.done [#allocation5], 256
    $region17: #{tpu_custom_call.1} parent=1 // pred_fallthru
      _
    %v39 = vld [vmem:[#allocation2] sm:$0xff]
    %v40 = vld [vmem:[#allocation2 + $0x8] sm:$0xff]
    %v41 = vld [vmem:[#allocation4] sm:$0xff]
    %v42 = vld [vmem:[#allocation4 + $0x8] sm:$0xff]
    %vm43 = vcmask 261120
    %v44 = vsel %vm43, %v39, -inf
    %45 = vmax.xlane.f32.xlu0 %v44
    %v46 = vpop.xlane.xlu0 %45
    %v47 = vsel %vm43, %v40, -inf
    %48 = vmax.xlane.f32.xlu0 %v47
    %v49 = vpop.xlane.xlu0 %48
    %v50 = vsel %vm43, %v41, -inf
    %51 = vmax.xlane.f32.xlu0 %v50
    %v52 = vpop.xlane.xlu0 %51
    %v53 = vsel %vm43, %v42, -inf
    %54 = vmax.xlane.f32.xlu0 %v53
    %v55 = vpop.xlane.xlu0 %54
    %v56 = vadd.f32 %v46, %v52
    %v57 = vadd.f32 %v49, %v55
    %v58 = vrcp.pop %v56
    %v59 = vrcp.pop %v57
    %v60 = vmul.f32 %v46, 8.0
    %v61 = vmul.f32 %v49, 8.0
    %v62 = vmul.f32 %v60, %v58
    %v63 = vmul.f32 %v61, %v59
    %v64 = vmul.f32 %v52, 8.0
    %v65 = vmul.f32 %v55, 8.0
    %v66 = vmul.f32 %v64, %v58
    %v67 = vmul.f32 %v65, %v59
    %v68 = vrcp.pop %v62
    %v69 = vrcp.pop %v63
    %v70 = vrcp.pop %v66
    %v71 = vrcp.pop %v67
    %v72 = vmul.f32 %v39, %v68
    %v73 = vmul.f32 %v40, %v69
    %v74 = vmul.f32 %v41, %v70
    %v75 = vmul.f32 %v42, %v71
    %v76 = vsel %vm43, %v72, -inf
    %77 = vmax.xlane.f32.xlu0 %v76
    %v78 = vpop.xlane.xlu0 %77
    %v79 = vsel %vm43, %v73, -inf
    %80 = vmax.xlane.f32.xlu0 %v79
    %v81 = vpop.xlane.xlu0 %80
    %v82 = vsub.f32 %v72, %v78
    %v83 = vsub.f32 %v73, %v81
    %v84 = vsel %vm43, %v74, -inf
    %85 = vmax.xlane.f32.xlu0 %v84
    %v86 = vpop.xlane.xlu0 %85
    %v87 = vsel %vm43, %v75, -inf
    %88 = vmax.xlane.f32.xlu0 %v87
    %v89 = vpop.xlane.xlu0 %88
    %v90 = vsub.f32 %v74, %v86
    %v91 = vsub.f32 %v75, %v89
    %v92 = vmul.f32 %v82, 1.442695
    %v93 = vpow.pop %v92
    %v94 = vmul.f32 %v83, 1.442695
    %v95 = vpow.pop %v94
    %v96 = vmul.f32 %v90, 1.442695
    %v97 = vpow.pop %v96
    %v98 = vmul.f32 %v91, 1.442695
    %v99 = vpow.pop %v98
    %v100 = vsel %vm43, %v93, 0.0
    %101 = vadd.xlane.f32.xlu0 %v100
    %v102 = vpop.xlane.xlu0 %101
    %v103 = vsel %vm43, %v95, 0.0
    %104 = vadd.xlane.f32.xlu0 %v103
    %v105 = vpop.xlane.xlu0 %104
    %v106 = vsel %vm43, %v97, 0.0
    %107 = vadd.xlane.f32.xlu0 %v106
    %v108 = vpop.xlane.xlu0 %107
    %v109 = vsel %vm43, %v99, 0.0
    %110 = vadd.xlane.f32.xlu0 %v109
    %v111 = vpop.xlane.xlu0 %110
    %v112 = vsub.f32 %v90, %v82
    %v113 = vsub.f32 %v91, %v83
    %v114 = vmul.f32 %v97, %v112
    %v115 = vmul.f32 %v99, %v113
    %v116 = vsel %vm43, %v114, 0.0
    %117 = vadd.xlane.f32.xlu0 %v116
    %v118 = vpop.xlane.xlu0 %117
    %v119 = vsel %vm43, %v115, 0.0
    %120 = vadd.xlane.f32.xlu0 %v119
    %v121 = vpop.xlane.xlu0 %120
    %v122 = vrcp.pop %v108
    %v123 = vrcp.pop %v111
    %v124 = vmul.f32 %v118, %v122
    %v125 = vmul.f32 %v121, %v123
    %v126 = vlog2.pop %v102
    %v127 = vmul.f32 %v126, 0.6931472
    %v128 = vlog2.pop %v105
    %v129 = vmul.f32 %v128, 0.6931472
    %v130 = vlog2.pop %v108
    %v131 = vmul.f32 %v130, 0.6931472
    %v132 = vlog2.pop %v111
    %v133 = vmul.f32 %v132, 0.6931472
    %v134 = vsub.f32 %v127, %v131
    %v135 = vsub.f32 %v129, %v133
    %v136 = vadd.f32 %v124, %v134
    %v137 = vadd.f32 %v125, %v135
    %v138 = vmul.f32 %v66, %v62
    %v139 = vmul.f32 %v67, %v63
    %v140 = vmul.f32 %v136, %v138
    %v141 = vmul.f32 %v137, %v139
    %vm142 = vcmask 7168
    %143 = vst.msk [vmem:[%s2] sm:$0xff] %vm142, %v140
    %144 = vst.msk [vmem:[%s2 + $0x8] sm:$0xff] %vm142, %v141
    // Predicated region
    $region18: #{tpu_custom_call.1} parent=1 // pred_check
      _
    $region19: #{tpu_custom_call.1} parent=1 // pred_check_branch
      %146 = sbr.rel (0) target = $region21
    $region20: #{tpu_custom_call.1} parent=1 // pred_region
      _
    $region21: #{tpu_custom_call.1} parent=1 // pred_fallthru
      _
    // Predicated region
    $region22: #{tpu_custom_call.1} parent=1 // pred_check
      _
    $region23: #{tpu_custom_call.1} parent=1 // pred_check_branch
      %148 = sbr.rel (0) target = $region25
    $region24: #{tpu_custom_call.1} parent=1 // pred_region
      _
    $region25: #{tpu_custom_call.1} parent=1 // pred_fallthru
      _
    %149 = vsyncpa [#allocation3], 1
    %150 = vsyncpa [#allocation5], 1

</llo_original>
